<compile_context>
chip_gen: v6e
topology: v6e:2x2x1
jax: 0.10.0
libtpu: 0.0.40
codegen_flags: <defaults>
</compile_context>

<pallas_src>
import functools

import jax
import jax.numpy as jnp
from jax import lax
from jax.experimental import pallas as pl
from jax.experimental.pallas import tpu as pltpu

LANES = 128
SUBLANES = 8


def _round_up(v, m):
    return -(-v // m) * m


def _sublane_align(dtype):
    # Second-minor block dim must respect sublane packing: f32 -> 8, bf16 -> 16,
    # int8/bool -> 32.
    return max(SUBLANES, 32 // jnp.dtype(dtype).itemsize)


def _device_defaults():
    """(block_rows, num_chunks) tuned per TPU generation."""
    try:
        kind = jax.devices()[0].device_kind.lower()
    except Exception:
        kind = ""
    if "v5 lite" in kind or "v5e" in kind or "v5lite" in kind:
        return 4096, 1    # 16 MiB default scoped VMEM; single TC
    if "v6" in kind or "trillium" in kind:
        return 8192, 1    # 32 MiB scoped VMEM; single TC
    if "v7" in kind:
        return 8192, 2    # 2 TCs -> keep the parallel chunk axis
    return 4096, 1        # safe default for anything else


def _partial_reduce(v, pr):
    """(block_rows, 128) -> (pr, 128) partial sums.

    pr up to 32 gives 4 independent (8,128) vreg accumulation chains instead of
    one long serial chain, while keeping accumulator traffic fixed.
    """
    r = v.shape[0] // pr
    if r <= 1:
        return v
    return v.reshape(r, pr, LANES).sum(axis=0)


def _dice_kernel(x_ref, t_ref, o_int_ref, o_sum_ref, acc_ref, *,
                 alpha, n_valid, full_tiles, tile_elems, block_rows, pr,
                 steps_per_chunk, has_tail, approx_recip):
    """Grid = (chunks [parallel], steps [arbitrary reduction]).

    acc_ref : VMEM (2, pr, 128) f32 accumulators:
        acc[0] : sum of adaptive * target      (intersection partials)
        acc[1] : sum of adaptive + target      (fused denominator partials)
    Each chunk writes its (pr,128) partials to its own output block on the
    final reduction step; the wrapper combines them into the scalar loss.
    """
    c = pl.program_id(0)
    i = pl.program_id(1)

    @pl.when(i == 0)
    def _():
        acc_ref[...] = jnp.zeros_like(acc_ref)

    x = x_ref[...].astype(jnp.float32)
    t = t_ref[...].astype(jnp.float32)

    if approx_recip:
        # exp + approx reciprocal both stay on the EUP slot (v7x option).
        p = pl.reciprocal(1.0 + jnp.exp(-x), approx=True)
    else:
        p = jax.nn.sigmoid(x)

    if alpha == 0.0:
        adaptive = p
    else:
        ai = int(alpha)
        if float(ai) == float(alpha) and 1 <= ai <= 4:
            # Small integer alpha: repeated multiplies keep the EUP free.
            base = 1.0 - p
            w = base
            for _ in range(ai - 1):
                w = w * base
            adaptive = w * p
        else:
            adaptive = jnp.power(1.0 - p, jnp.float32(alpha)) * p

    prod = adaptive * t          # intersection stream
    s = adaptive + t             # fused denominator: sum(adaptive) + sum(target)

    if has_tail:
        g = c * steps_per_chunk + i          # global (unclamped) tile index
        needs_mask = g >= full_tiles         # static full_tiles -> cheap compare

        @pl.when(jnp.logical_not(needs_mask))
        def _():
            acc_ref[0] += _partial_reduce(prod, pr)
            acc_ref[1] += _partial_reduce(s, pr)

        @pl.when(needs_mask)
        def _():
            # Mask BOTH streams: tail tiles may contain undefined data
            # (partial / overrun blocks) or lane-pad zeros.
            row = lax.broadcasted_iota(jnp.int32, (block_rows, LANES), 0)
            lane = lax.broadcasted_iota(jnp.int32, (block_rows, LANES), 1)
            local = row * LANES + lane
            rem = jnp.int32(n_valid) - g * jnp.int32(tile_elems)  # may be <= 0
            valid = local < rem
            acc_ref[0] += _partial_reduce(jnp.where(valid, prod, 0.0), pr)
            acc_ref[1] += _partial_reduce(jnp.where(valid, s, 0.0), pr)
    else:
        acc_ref[0] += _partial_reduce(prod, pr)
        acc_ref[1] += _partial_reduce(s, pr)

    @pl.when(i == pl.num_programs(1) - 1)
    def _():
        o_int_ref[...] = acc_ref[0]
        o_sum_ref[...] = acc_ref[1]


def dice_loss(input_tensor, target, *, alpha=0.0, smoothing_factor=1.0,
              block_rows=None, num_chunks=None, approx_reciprocal=False):
    """JAX/Pallas equivalent of DiceLoss.forward (scalar f32 result)."""
    x = jnp.reshape(input_tensor, (-1,))
    t = jnp.reshape(target, (-1,))

    # Keep narrow HBM dtypes; the kernel casts to f32 on the fly.
    if x.dtype not in (jnp.float32, jnp.bfloat16):
        x = x.astype(jnp.float32)
    if t.dtype == jnp.bool_:
        t = t.astype(jnp.int8)           # 1-byte stream instead of 4-byte f32
    elif t.dtype not in (jnp.float32, jnp.bfloat16, jnp.int8, jnp.int32):
        t = t.astype(jnp.float32)

    n = int(x.shape[0])
    if n == 0:
        sf = jnp.float32(smoothing_factor)
        return (1.0 - sf / sf).astype(jnp.float32)

    dev_block, dev_chunks = _device_defaults()
    if block_rows is None:
        block_rows = dev_block
    if num_chunks is None:
        num_chunks = dev_chunks

    row_align = max(_sublane_align(x.dtype), _sublane_align(t.dtype))
    rows_exact = -(-n // LANES)

    block_rows = max(row_align, (int(block_rows) // row_align) * row_align)
    if rows_exact <= block_rows:
        # Tiny input: one aligned tile covers everything.
        block_rows = _round_up(rows_exact, row_align)
        rows = block_rows
    else:
        rows = rows_exact                # last tile may be partial (masked)

    n_store = rows * LANES
    if n_store != n:
        # Only a lane-remainder (<128 elems) or tiny-input pad; never a
        # tile-boundary or chunk-rounding pad.  n % 128 == 0 is copy-free.
        # TODO(synk): a fully copy-free ragged path would need 1-D blocks or a
        # wrapper-side remainder reduction; not worth it for <128 pad elements.
        x = jnp.pad(x, (0, n_store - n))
        t = jnp.pad(t, (0, n_store - n))

    x2 = x.reshape(rows, LANES)
    t2 = t.reshape(rows, LANES)

    tile_elems = block_rows * LANES
    total_tiles = -(-rows // block_rows)
    num_chunks = max(1, min(int(num_chunks), total_tiles))
    steps = -(-total_tiles // num_chunks)

    pr = 32 if block_rows % 32 == 0 else (16 if block_rows % 16 == 0 else SUBLANES)
    full_tiles = n // tile_elems                        # tiles needing no mask
    has_tail = (num_chunks * steps * tile_elems) != n   # any masked tile at all

    kernel = functools.partial(
        _dice_kernel,
        alpha=float(alpha),
        n_valid=int(n),
        full_tiles=int(full_tiles),
        tile_elems=int(tile_elems),
        block_rows=int(block_rows),
        pr=int(pr),
        steps_per_chunk=int(steps),
        has_tail=bool(has_tail),
        approx_recip=bool(approx_reciprocal),
    )

    last_tile = total_tiles - 1
    # Clamp so chunk-rounding overrun steps re-read an in-bounds tile (their
    # contribution is masked to zero in-kernel).
    in_index = lambda c, i: (jnp.minimum(c * steps + i, last_tile), 0)
    in_spec_x = pl.BlockSpec((block_rows, LANES), in_index)
    in_spec_t = pl.BlockSpec((block_rows, LANES), in_index)
    out_spec = pl.BlockSpec((None, pr, LANES), lambda c, i: (c, 0, 0))

    out_bytes = 2 * num_chunks * pr * LANES * 4
    cost = pl.CostEstimate(
        flops=8 * n,
        transcendentals=n,
        bytes_accessed=int(x2.size * x2.dtype.itemsize
                           + t2.size * t2.dtype.itemsize + out_bytes),
    )

    out_int, out_sum = pl.pallas_call(
        kernel,
        out_shape=(
            jax.ShapeDtypeStruct((num_chunks, pr, LANES), jnp.float32),
            jax.ShapeDtypeStruct((num_chunks, pr, LANES), jnp.float32),
        ),
        grid_spec=pltpu.PrefetchScalarGridSpec(
            num_scalar_prefetch=0,
            grid=(num_chunks, steps),
            in_specs=[in_spec_x, in_spec_t],
            out_specs=[out_spec, out_spec],
            scratch_shapes=[pltpu.VMEM((2, pr, LANES), jnp.float32)],
        ),
        compiler_params=pltpu.CompilerParams(
            dimension_semantics=("parallel", "arbitrary")),
        cost_estimate=cost,
    )(x2, t2)

    intersection = jnp.sum(out_int)
    adaptive_plus_target = jnp.sum(out_sum)
    numerator = 2.0 * intersection + smoothing_factor
    denominator = adaptive_plus_target + smoothing_factor
    return (1.0 - numerator / denominator).astype(jnp.float32)


def _dice_loss_ref(input_tensor, target, alpha=0.0, smoothing_factor=1.0):
    x = input_tensor.reshape(-1).astype(jnp.float32)
    t = target.reshape(-1).astype(jnp.float32)
    p = jax.nn.sigmoid(x)
    adaptive = (1.0 - p) ** alpha * p
    num = 2.0 * jnp.sum(adaptive * t) + smoothing_factor
    den = jnp.sum(adaptive) + jnp.sum(t) + smoothing_factor
    return 1.0 - num / den


if __name__ == "__main__":
    key = jax.random.PRNGKey(0)
    k1, k2, k3, k4 = jax.random.split(key, 4)

    # Case 1: NCHW-style f32 logits with BOOL targets (streamed as int8,
    # no wrapper f32 cast); n is a multiple of 128.
    logits = jax.random.normal(k1, (2, 4, 16, 16), dtype=jnp.float32)
    target_b = jax.random.bernoulli(k2, p=0.3, shape=(2, 4, 16, 16))
    loss = jax.block_until_ready(
        dice_loss(logits, target_b, alpha=0.0, smoothing_factor=1.0))
    ref = _dice_loss_ref(logits, target_b, alpha=0.0, smoothing_factor=1.0)
    assert jnp.allclose(loss, ref, rtol=1e-5, atol=1e-6), (loss, ref)

    # Case 2: ragged size (not a multiple of 128) + nonzero alpha, exercising
    # the lane-remainder masking and repeated-multiply focal weighting.
    logits2 = jax.random.normal(k3, (3, 5, 7, 11), dtype=jnp.float32)
    target2 = jax.random.bernoulli(k4, p=0.4, shape=(3, 5, 7, 11)).astype(
        jnp.float32)
    loss2 = jax.block_until_ready(
        dice_loss(logits2, target2, alpha=1.0, smoothing_factor=1.0))
    ref2 = _dice_loss_ref(logits2, target2, alpha=1.0, smoothing_factor=1.0)
    assert jnp.allclose(loss2, ref2, rtol=1e-5, atol=1e-6), (loss2, ref2)

    # Case 3: tiny tile forces multiple grid steps, the 2-way chunk axis with
    # an uneven split (clamped overrun step) and a masked tail tile.
    n3 = 5000
    logits3 = jax.random.normal(k1, (n3,), dtype=jnp.float32)
    target3 = jax.random.bernoulli(k2, p=0.2, shape=(n3,)).astype(jnp.float32)
    loss3 = jax.block_until_ready(
        dice_loss(logits3, target3, alpha=0.0, smoothing_factor=1.0,
                  block_rows=8, num_chunks=2))
    ref3 = _dice_loss_ref(logits3, target3, alpha=0.0, smoothing_factor=1.0)
    assert jnp.allclose(loss3, ref3, rtol=1e-5, atol=1e-6), (loss3, ref3)

    # Case 4: n multiple of 128 (fully copy-free path) whose row count does NOT
    # divide block_rows -> non-dividing (partial) last block masked in-kernel.
    n4 = 300 * 128
    logits4 = jax.random.normal(k3, (n4,), dtype=jnp.float32)
    target4 = jax.random.bernoulli(k4, p=0.5, shape=(n4,)).astype(jnp.float32)
    loss4 = jax.block_until_ready(
        dice_loss(logits4, target4, alpha=2.0, smoothing_factor=1.0,
                  block_rows=64, num_chunks=1))
    ref4 = _dice_loss_ref(logits4, target4, alpha=2.0, smoothing_factor=1.0)
    assert jnp.allclose(loss4, ref4, rtol=1e-5, atol=1e-6), (loss4, ref4)

    # Case 5: bf16 logits + bool targets (both streamed narrow), tiny input.
    logits5 = jax.random.normal(k1, (4, 8, 32), dtype=jnp.float32).astype(
        jnp.bfloat16)
    target5 = jax.random.bernoulli(k2, p=0.35, shape=(4, 8, 32))
    loss5 = jax.block_until_ready(
        dice_loss(logits5, target5, alpha=0.0, smoothing_factor=1.0))
    ref5 = _dice_loss_ref(logits5, target5, alpha=0.0, smoothing_factor=1.0)
    assert jnp.allclose(loss5, ref5, rtol=1e-5, atol=1e-6), (loss5, ref5)

    # Case 6: exactly tile-divisible input -> has_tail=False fast path.
    n6 = 4096
    logits6 = jax.random.normal(k3, (n6,), dtype=jnp.float32)
    target6 = jax.random.bernoulli(k4, p=0.25, shape=(n6,)).astype(jnp.float32)
    loss6 = jax.block_until_ready(
        dice_loss(logits6, target6, alpha=0.0, smoothing_factor=1.0,
                  block_rows=8))
    ref6 = _dice_loss_ref(logits6, target6, alpha=0.0, smoothing_factor=1.0)
    assert jnp.allclose(loss6, ref6, rtol=1e-5, atol=1e-6), (loss6, ref6)

    print("KERNEL_OK")
</pallas_src>

<mosaic_0001>
module attributes {stable_mosaic.version = 11 : i64} {
  func.func @_dice_kernel(%arg0: i32, %arg1: i32, %arg2: memref<32x128xf32, #tpu.memory_space<vmem>>, %arg3: memref<32x128xi8, #tpu.memory_space<vmem>>, %arg4: memref<1x32x128xf32, #tpu.memory_space<vmem>>, %arg5: memref<1x32x128xf32, #tpu.memory_space<vmem>>, %arg6: memref<2x32x128xf32, #tpu.memory_space<vmem>>) attributes {dimension_semantics = [#tpu.dimension_semantics<parallel>, #tpu.dimension_semantics<arbitrary>], iteration_bounds = array<i64: 1, 1>, scalar_prefetch = 0 : i64, scratch_operands = 1 : i64, tpu.core_type = #tpu.core_type<tc>, window_params = [{transform_indices = @transform_0, window_bounds = array<i64: 32, 128>}, {transform_indices = @transform_1, window_bounds = array<i64: 32, 128>}, {transform_indices = @transform_2, window_bounds = array<i64: 1, 32, 128>}, {transform_indices = @transform_3, window_bounds = array<i64: 1, 32, 128>}]} {
    %c0_i32 = arith.constant 0 : i32
    %0 = arith.cmpi eq, %arg1, %c0_i32 : i32
    %1 = arith.extui %0 : i1 to i32
    %c0_i32_0 = arith.constant 0 : i32
    %2 = arith.cmpi ne, %1, %c0_i32_0 : i32
    scf.if %2 {
      %cst_9 = arith.constant 0.000000e+00 : f32
      %24 = vector.broadcast %cst_9 : f32 to vector<2x32x128xf32>
      %c0_10 = arith.constant 0 : index
      %c0_11 = arith.constant 0 : index
      %c0_12 = arith.constant 0 : index
      %25 = vector.load %arg6[%c0_10, %c0_11, %c0_12] : memref<2x32x128xf32, #tpu.memory_space<vmem>>, vector<2x32x128xf32>
      tpu.vector_store %arg6[%c0_10, %c0_11, %c0_12], %24 {strides = array<i32>} : memref<2x32x128xf32, #tpu.memory_space<vmem>>, vector<2x32x128xf32>,
    } else {
    }
    %c0 = arith.constant 0 : index
    %c0_1 = arith.constant 0 : index
    %3 = vector.load %arg2[%c0, %c0_1] : memref<32x128xf32, #tpu.memory_space<vmem>>, vector<32x128xf32>
    %c0_2 = arith.constant 0 : index
    %c0_3 = arith.constant 0 : index
    %4 = vector.load %arg3[%c0_2, %c0_3] : memref<32x128xi8, #tpu.memory_space<vmem>>, vector<32x128xi8>
    %5 = arith.sitofp %4 : vector<32x128xi8> to vector<32x128xf32>
    %6 = arith.negf %3 : vector<32x128xf32>
    %7 = math.exp %6 : vector<32x128xf32>
    %cst = arith.constant 1.000000e+00 : f32
    %8 = vector.broadcast %cst : f32 to vector<32x128xf32>
    %9 = arith.addf %8, %7 : vector<32x128xf32>
    %10 = arith.divf %8, %9 : vector<32x128xf32>
    %11 = arith.mulf %10, %5 : vector<32x128xf32>
    %12 = arith.addf %10, %5 : vector<32x128xf32>
    %c1_i32 = arith.constant 1 : i32
    %13 = arith.muli %arg0, %c1_i32 : i32
    %14 = arith.addi %13, %arg1 : i32
    %c0_i32_4 = arith.constant 0 : i32
    %15 = arith.cmpi sge, %14, %c0_i32_4 : i32
    %true = arith.constant true
    %16 = arith.xori %15, %true : i1
    %17 = arith.extui %16 : i1 to i32
    %c0_i32_5 = arith.constant 0 : i32
    %18 = arith.cmpi ne, %17, %c0_i32_5 : i32
    scf.if %18 {
      %c0_9 = arith.constant 0 : index
      %c0_10 = arith.constant 0 : index
      %c0_11 = arith.constant 0 : index
      %24 = vector.load %arg6[%c0_9, %c0_10, %c0_11] : memref<2x32x128xf32, #tpu.memory_space<vmem>>, vector<1x32x128xf32>
      %25 = vector.shape_cast %24 : vector<1x32x128xf32> to vector<32x128xf32>
      %26 = arith.addf %25, %11 : vector<32x128xf32>
      %c0_12 = arith.constant 0 : index
      %c0_13 = arith.constant 0 : index
      %c0_14 = arith.constant 0 : index
      %27 = vector.load %arg6[%c0_12, %c0_13, %c0_14] : memref<2x32x128xf32, #tpu.memory_space<vmem>>, vector<1x32x128xf32>
      %28 = vector.shape_cast %27 : vector<1x32x128xf32> to vector<32x128xf32>
      %29 = vector.shape_cast %26 : vector<32x128xf32> to vector<1x32x128xf32>
      tpu.vector_store %arg6[%c0_12, %c0_13, %c0_14], %29 {strides = array<i32>} : memref<2x32x128xf32, #tpu.memory_space<vmem>>, vector<1x32x128xf32>,
      %c1 = arith.constant 1 : index
      %c0_15 = arith.constant 0 : index
      %c0_16 = arith.constant 0 : index
      %30 = vector.load %arg6[%c1, %c0_15, %c0_16] : memref<2x32x128xf32, #tpu.memory_space<vmem>>, vector<1x32x128xf32>
      %31 = vector.shape_cast %30 : vector<1x32x128xf32> to vector<32x128xf32>
      %32 = arith.addf %31, %12 : vector<32x128xf32>
      %c1_17 = arith.constant 1 : index
      %c0_18 = arith.constant 0 : index
      %c0_19 = arith.constant 0 : index
      %33 = vector.load %arg6[%c1_17, %c0_18, %c0_19] : memref<2x32x128xf32, #tpu.memory_space<vmem>>, vector<1x32x128xf32>
      %34 = vector.shape_cast %33 : vector<1x32x128xf32> to vector<32x128xf32>
      %35 = vector.shape_cast %32 : vector<32x128xf32> to vector<1x32x128xf32>
      tpu.vector_store %arg6[%c1_17, %c0_18, %c0_19], %35 {strides = array<i32>} : memref<2x32x128xf32, #tpu.memory_space<vmem>>, vector<1x32x128xf32>,
    } else {
    }
    %19 = arith.extui %15 : i1 to i32
    %c0_i32_6 = arith.constant 0 : i32
    %20 = arith.cmpi ne, %19, %c0_i32_6 : i32
    scf.if %20 {
      %24 = tpu.iota {dimensions = array<i32: 0>} : vector<32x128xi32>
      %25 = tpu.iota {dimensions = array<i32: 1>} : vector<32x128xi32>
      %c128_i32 = arith.constant 128 : i32
      %26 = vector.broadcast %c128_i32 : i32 to vector<32x128xi32>
      %27 = arith.muli %24, %26 : vector<32x128xi32>
      %28 = arith.addi %27, %25 : vector<32x128xi32>
      %c4096_i32 = arith.constant 4096 : i32
      %29 = arith.muli %14, %c4096_i32 : i32
      %c2048_i32 = arith.constant 2048 : i32
      %30 = arith.subi %c2048_i32, %29 : i32
      %31 = vector.broadcast %30 : i32 to vector<32x128xi32>
      %32 = arith.cmpi slt, %28, %31 : vector<32x128xi32>
      %c0_9 = arith.constant 0 : index
      %c0_10 = arith.constant 0 : index
      %c0_11 = arith.constant 0 : index
      %33 = vector.load %arg6[%c0_9, %c0_10, %c0_11] : memref<2x32x128xf32, #tpu.memory_space<vmem>>, vector<1x32x128xf32>
      %34 = vector.shape_cast %33 : vector<1x32x128xf32> to vector<32x128xf32>
      %cst_12 = arith.constant 0.000000e+00 : f32
      %35 = vector.broadcast %cst_12 : f32 to vector<32x128xf32>
      %36 = arith.select %32, %11, %35 : vector<32x128xi1>, vector<32x128xf32>
      %37 = arith.addf %34, %36 : vector<32x128xf32>
      %c0_13 = arith.constant 0 : index
      %c0_14 = arith.constant 0 : index
      %c0_15 = arith.constant 0 : index
      %38 = vector.load %arg6[%c0_13, %c0_14, %c0_15] : memref<2x32x128xf32, #tpu.memory_space<vmem>>, vector<1x32x128xf32>
      %39 = vector.shape_cast %38 : vector<1x32x128xf32> to vector<32x128xf32>
      %40 = vector.shape_cast %37 : vector<32x128xf32> to vector<1x32x128xf32>
      tpu.vector_store %arg6[%c0_13, %c0_14, %c0_15], %40 {strides = array<i32>} : memref<2x32x128xf32, #tpu.memory_space<vmem>>, vector<1x32x128xf32>,
      %c1 = arith.constant 1 : index
      %c0_16 = arith.constant 0 : index
      %c0_17 = arith.constant 0 : index
      %41 = vector.load %arg6[%c1, %c0_16, %c0_17] : memref<2x32x128xf32, #tpu.memory_space<vmem>>, vector<1x32x128xf32>
      %42 = vector.shape_cast %41 : vector<1x32x128xf32> to vector<32x128xf32>
      %cst_18 = arith.constant 0.000000e+00 : f32
      %43 = vector.broadcast %cst_18 : f32 to vector<32x128xf32>
      %44 = arith.select %32, %12, %43 : vector<32x128xi1>, vector<32x128xf32>
      %45 = arith.addf %42, %44 : vector<32x128xf32>
      %c1_19 = arith.constant 1 : index
      %c0_20 = arith.constant 0 : index
      %c0_21 = arith.constant 0 : index
      %46 = vector.load %arg6[%c1_19, %c0_20, %c0_21] : memref<2x32x128xf32, #tpu.memory_space<vmem>>, vector<1x32x128xf32>
      %47 = vector.shape_cast %46 : vector<1x32x128xf32> to vector<32x128xf32>
      %48 = vector.shape_cast %45 : vector<32x128xf32> to vector<1x32x128xf32>
      tpu.vector_store %arg6[%c1_19, %c0_20, %c0_21], %48 {strides = array<i32>} : memref<2x32x128xf32, #tpu.memory_space<vmem>>, vector<1x32x128xf32>,
    } else {
    }
    %c0_i32_7 = arith.constant 0 : i32
    %21 = arith.cmpi eq, %arg1, %c0_i32_7 : i32
    %22 = arith.extui %21 : i1 to i32
    %c0_i32_8 = arith.constant 0 : i32
    %23 = arith.cmpi ne, %22, %c0_i32_8 : i32
    scf.if %23 {
      %c0_9 = arith.constant 0 : index
      %c0_10 = arith.constant 0 : index
      %c0_11 = arith.constant 0 : index
      %24 = vector.load %arg6[%c0_9, %c0_10, %c0_11] : memref<2x32x128xf32, #tpu.memory_space<vmem>>, vector<1x32x128xf32>
      %25 = vector.shape_cast %24 : vector<1x32x128xf32> to vector<32x128xf32>
      %c0_12 = arith.constant 0 : index
      %c0_13 = arith.constant 0 : index
      %c0_14 = arith.constant 0 : index
      %26 = vector.load %arg4[%c0_12, %c0_13, %c0_14] : memref<1x32x128xf32, #tpu.memory_space<vmem>>, vector<1x32x128xf32>
      %27 = vector.shape_cast %26 : vector<1x32x128xf32> to vector<32x128xf32>
      %28 = vector.shape_cast %25 : vector<32x128xf32> to vector<1x32x128xf32>
      tpu.vector_store %arg4[%c0_12, %c0_13, %c0_14], %28 {strides = array<i32>} : memref<1x32x128xf32, #tpu.memory_space<vmem>>, vector<1x32x128xf32>,
      %c1 = arith.constant 1 : index
      %c0_15 = arith.constant 0 : index
      %c0_16 = arith.constant 0 : index
      %29 = vector.load %arg6[%c1, %c0_15, %c0_16] : memref<2x32x128xf32, #tpu.memory_space<vmem>>, vector<1x32x128xf32>
      %30 = vector.shape_cast %29 : vector<1x32x128xf32> to vector<32x128xf32>
      %c0_17 = arith.constant 0 : index
      %c0_18 = arith.constant 0 : index
      %c0_19 = arith.constant 0 : index
      %31 = vector.load %arg5[%c0_17, %c0_18, %c0_19] : memref<1x32x128xf32, #tpu.memory_space<vmem>>, vector<1x32x128xf32>
      %32 = vector.shape_cast %31 : vector<1x32x128xf32> to vector<32x128xf32>
      %33 = vector.shape_cast %30 : vector<32x128xf32> to vector<1x32x128xf32>
      tpu.vector_store %arg5[%c0_17, %c0_18, %c0_19], %33 {strides = array<i32>} : memref<1x32x128xf32, #tpu.memory_space<vmem>>, vector<1x32x128xf32>,
    } else {
    }
    return
  }
  func.func @transform_0(%arg0: i32, %arg1: i32) -> (i32, i32) {
    %c1_i32 = arith.constant 1 : i32
    %0 = arith.muli %arg0, %c1_i32 : i32
    %1 = arith.addi %0, %arg1 : i32
    %c0_i32 = arith.constant 0 : i32
    %2 = arith.minsi %1, %c0_i32 : i32
    %c0_i32_0 = arith.constant 0 : i32
    %c0_i32_1 = arith.constant 0 : i32
    return %2, %c0_i32_0 : i32, i32
  }
  func.func @transform_1(%arg0: i32, %arg1: i32) -> (i32, i32) {
    %c1_i32 = arith.constant 1 : i32
    %0 = arith.muli %arg0, %c1_i32 : i32
    %1 = arith.addi %0, %arg1 : i32
    %c0_i32 = arith.constant 0 : i32
    %2 = arith.minsi %1, %c0_i32 : i32
    %c0_i32_0 = arith.constant 0 : i32
    %c0_i32_1 = arith.constant 0 : i32
    return %2, %c0_i32_0 : i32, i32
  }
  func.func @transform_2(%arg0: i32, %arg1: i32) -> (i32, i32, i32) {
    %c0_i32 = arith.constant 0 : i32
    %c0_i32_0 = arith.constant 0 : i32
    %c0_i32_1 = arith.constant 0 : i32
    return %arg0, %c0_i32, %c0_i32_0 : i32, i32, i32
  }
  func.func @transform_3(%arg0: i32, %arg1: i32) -> (i32, i32, i32) {
    %c0_i32 = arith.constant 0 : i32
    %c0_i32_0 = arith.constant 0 : i32
    %c0_i32_1 = arith.constant 0 : i32
    return %arg0, %c0_i32, %c0_i32_0 : i32, i32, i32
  }
}

</mosaic_0001>

<llo_original>
// kernel: tpu_custom_call.1
$region0: #{tpu_custom_call.1}
  #allocation0 [shape = 'u32[]', space=smem, size = 0x4, offset = 0x4, fixed_abs, tag = 'smem constant byte address 0x4 - core index']
  #allocation1 [shape = 'u32[144,128]{1,0:T(1,128)}', space=vmem, size = 0x12000, scoped, tag = 'internal scratch']
  #allocation2 [shape = 'f32[2,32,128]{2,1,0:T(8,128)}', space=vmem, size = 0x8000, scoped, tag = 'scratch operand']
  %s0 = inlined_call_operand.hbm [shape: f32[32,128], index: 0, kind: input, shape index: {}]
  %s1 = inlined_call_operand.hbm [shape: s8[32,128], index: 1, kind: input, shape index: {}]
  %s2 = inlined_call_operand.hbm [shape: f32[1,32,128], index: 2, kind: output, shape index: {0}]
  %s3 = inlined_call_operand.hbm [shape: f32[1,32,128], index: 3, kind: output, shape index: {1}]
  %4 = xla_tuple %s2, %s3
  %s5 = sld [smem:[#allocation0]]
  $region50: #{tpu_custom_call.1} parent=0
    _
  %s7 = ssub.s32 1, %s5
  %s8 = scalar_select 0, %s7, %s5
  $region1: #{tpu_custom_call.1} parent=0
    #allocation3 [shape = 'u8[16384]{0}', space=vmem, size = 0x4000, scoped, tag = 'input window, operand 0, single buffered']
    #allocation4 [shape = 's32[1]{0}', space=sflag, size = 0x4, scoped, tag = 'scoped memory for tpu_custom_call.1']
    #allocation5 [shape = 's32[1]{0}', space=sflag, size = 0x4, scoped, tag = 'scoped memory for tpu_custom_call.1']
    #allocation6 [shape = 'u8[4096]{0}', space=vmem, size = 0x1000, scoped, tag = 'input window, operand 1, single buffered']
    #allocation7 [shape = 's32[1]{0}', space=sflag, size = 0x4, scoped, tag = 'scoped memory for tpu_custom_call.1']
    #allocation8 [shape = 'u8[16384]{0}', space=vmem, size = 0x4000, scoped, tag = 'output window, operand 0, single buffered']
    #allocation9 [shape = 'u8[16384]{0}', space=vmem, size = 0x4000, scoped, tag = 'output window, operand 1, single buffered']
    #allocation10 [shape = 's32[1]{0}', space=sflag, size = 0x4, scoped, tag = 'scoped memory for tpu_custom_call.1']
    %9 = vsyncpa [#allocation4], 0
    %10 = vsyncpa [#allocation7], 0
    %11 = vsyncpa [#allocation5], 0
    %12 = vsyncpa [#allocation10], 0
    // Predicated region
    $region2: #{tpu_custom_call.1} parent=1 // pred_check
      _
    $region3: #{tpu_custom_call.1} parent=1 // pred_check_branch
      %14 = sbr.rel (0) target = $region5
    $region4: #{tpu_custom_call.1} parent=1 // pred_region
      %s15 = sadd.s32 0, 0
      %p16 = scmp.lt.s32.totalorder %s15, 0
      %s17 = scalar_select %p16, %s15, 0
      %s18 = smul.u32 4, %s17
      %s20 = ssub.s32 512, 512
      %21 = vsyncadd [#allocation4], %s20
      %s22 = smul.addr %s18, 128
      %s23 = scalar_lea.hbm %s0, %s22
      %s24 = sshll.u32 [#allocation3], 4
      %s25 = int_to_ptr.vmem [resolvable:$true] %s24
      %30 = dma.hbm_to_vmem [thread:$0]  %s23, 512, %s25, [#allocation4], 128, 128, 8
    $region5: #{tpu_custom_call.1} parent=1 // pred_fallthru
      _
    // Predicated region
    $region6: #{tpu_custom_call.1} parent=1 // pred_check
      _
    $region7: #{tpu_custom_call.1} parent=1 // pred_check_branch
      %32 = sbr.rel (0) target = $region9
    $region8: #{tpu_custom_call.1} parent=1 // pred_region
      %s33 = sadd.s32 0, 0
      %p34 = scmp.lt.s32.totalorder %s33, 0
      %s35 = scalar_select %p34, %s33, 0
      %s37 = ssub.s32 128, 128
      %38 = vsyncadd [#allocation7], %s37
      %s39 = smul.addr %s35, 128
      %s40 = scalar_lea.hbm %s1, %s39
      %s42 = sshll.u32 [#allocation6], 4
      %s43 = int_to_ptr.vmem [resolvable:$true] %s42
      %45 = dma.hbm_to_vmem [thread:$0]  %s40, 128, %s43, [#allocation7]
    $region9: #{tpu_custom_call.1} parent=1 // pred_fallthru
      _
    // Predicated region
    $region10: #{tpu_custom_call.1} parent=1 // pred_check
      _
    $region11: #{tpu_custom_call.1} parent=1 // pred_check_branch
      %47 = sbr.rel (0) target = $region13
    $region12: #{tpu_custom_call.1} parent=1 // pred_region
      %48 = dma.done [#allocation4], 512
    $region13: #{tpu_custom_call.1} parent=1 // pred_fallthru
      _
    // Predicated region
    $region14: #{tpu_custom_call.1} parent=1 // pred_check
      _
    $region15: #{tpu_custom_call.1} parent=1 // pred_check_branch
      %50 = sbr.rel (0) target = $region17
    $region16: #{tpu_custom_call.1} parent=1 // pred_region
      %51 = dma.done [#allocation7], 128
    $region17: #{tpu_custom_call.1} parent=1 // pred_fallthru
      _
    %s52 = sadd.s32 0, 0
    %p53 = scmp.lt.s32.totalorder %s52, 0
    %s54 = scalar_select %p53, %s52, 0
    %s55 = smul.u32 4, %s54
    %s56 = sadd.s32 0, 0
    %p57 = scmp.lt.s32.totalorder %s56, 0
    %s58 = scalar_select %p57, %s56, 0
    %p59 = scmp.eq.s32.totalorder 0, 0
    // Predicated region
    $region18: #{tpu_custom_call.1} parent=1 // pred_check
      %p60 = pneg %p59
    $region19: #{tpu_custom_call.1} parent=1 // pred_check_branch
      %62 = sbr.rel (%p60) target = $region21
    $region20: #{tpu_custom_call.1} parent=1 // pred_region
      %63 = vst [vmem:[#allocation2] sm:$0xff] 0.0
      %64 = vst [vmem:[#allocation2 + $0x8] sm:$0xff] 0.0
      %65 = vst [vmem:[#allocation2 + $0x10] sm:$0xff] 0.0
      %66 = vst [vmem:[#allocation2 + $0x18] sm:$0xff] 0.0
      %67 = vst [vmem:[#allocation2 + $0x20] sm:$0xff] 0.0
      %68 = vst [vmem:[#allocation2 + $0x28] sm:$0xff] 0.0
      %69 = vst [vmem:[#allocation2 + $0x30] sm:$0xff] 0.0
      %70 = vst [vmem:[#allocation2 + $0x38] sm:$0xff] 0.0
    $region21: #{tpu_custom_call.1} parent=1 // pred_fallthru
      _
    %v71 = vld [vmem:[#allocation3] sm:$0xff]
    %v72 = vld [vmem:[#allocation3 + $0x8] sm:$0xff]
    %v73 = vld [vmem:[#allocation3 + $0x10] sm:$0xff]
    %v74 = vld [vmem:[#allocation3 + $0x18] sm:$0xff]
    %v75 = vld [vmem:[#allocation6] sm:$0xff]
    %v76 = vunpack.c.0.s8 %v75
    %v77 = vunpack.c.1.s8 %v75
    %v78 = vunpack.c.2.s8 %v75
    %v79 = vunpack.c.3.s8 %v75
    %v80 = vcvt.s32.f32 %v76
    %v81 = vcvt.s32.f32 %v77
    %v82 = vcvt.s32.f32 %v78
    %v83 = vcvt.s32.f32 %v79
    %v84 = vxor.u32 %v71, 2147483648
    %v85 = vxor.u32 %v72, 2147483648
    %v86 = vxor.u32 %v73, 2147483648
    %v87 = vxor.u32 %v74, 2147483648
    %v88 = vmul.f32 %v84, 1.442695
    %v89 = vpow.pop %v88
    %v90 = vmul.f32 %v85, 1.442695
    %v91 = vpow.pop %v90
    %v92 = vmul.f32 %v86, 1.442695
    %v93 = vpow.pop %v92
    %v94 = vmul.f32 %v87, 1.442695
    %v95 = vpow.pop %v94
    %v96 = vadd.f32 %v89, 1.0
    %v97 = vadd.f32 %v91, 1.0
    %v98 = vadd.f32 %v93, 1.0
    %v99 = vadd.f32 %v95, 1.0
    %v100 = vrcp.pop %v96
    %v101 = vmul.f32 1.0, %v100
    %v102 = vrcp.pop %v97
    %v103 = vmul.f32 1.0, %v102
    %v104 = vrcp.pop %v98
    %v105 = vmul.f32 1.0, %v104
    %v106 = vrcp.pop %v99
    %v107 = vmul.f32 1.0, %v106
    %v108 = vmul.f32 %v101, %v80
    %v109 = vmul.f32 %v103, %v81
    %v110 = vmul.f32 %v105, %v82
    %v111 = vmul.f32 %v107, %v83
    %v112 = vadd.f32 %v101, %v80
    %v113 = vadd.f32 %v103, %v81
    %v114 = vadd.f32 %v105, %v82
    %v115 = vadd.f32 %v107, %v83
    %s116 = sadd.s32 0, 0
    %p117 = scmp.ge.s32.totalorder %s116, 0
    %p118 = scmp.lt.s32.totalorder %s116, 0
    // Predicated region
    $region22: #{tpu_custom_call.1} parent=1 // pred_check
      %p119 = pneg %p118
    $region23: #{tpu_custom_call.1} parent=1 // pred_check_branch
      %121 = sbr.rel (%p119) target = $region25
    $region24: #{tpu_custom_call.1} parent=1 // pred_region
      %v122 = vld [vmem:[#allocation2] sm:$0xff]
      %v123 = vld [vmem:[#allocation2 + $0x8] sm:$0xff]
      %v124 = vld [vmem:[#allocation2 + $0x10] sm:$0xff]
      %v125 = vld [vmem:[#allocation2 + $0x18] sm:$0xff]
      %v126 = vadd.f32 %v122, %v108
      %v127 = vadd.f32 %v123, %v109
      %v128 = vadd.f32 %v124, %v110
      %v129 = vadd.f32 %v125, %v111
      %130 = vst [vmem:[#allocation2] sm:$0xff] %v126
      %131 = vst [vmem:[#allocation2 + $0x8] sm:$0xff] %v127
      %132 = vst [vmem:[#allocation2 + $0x10] sm:$0xff] %v128
      %133 = vst [vmem:[#allocation2 + $0x18] sm:$0xff] %v129
      %s134 = scalar_lea.vmem [#allocation2], 32
      %v135 = vld [vmem:[%s134] sm:$0xff]
      %v136 = vld [vmem:[%s134 + $0x8] sm:$0xff]
      %v137 = vld [vmem:[%s134 + $0x10] sm:$0xff]
      %v138 = vld [vmem:[%s134 + $0x18] sm:$0xff]
      %v139 = vadd.f32 %v135, %v112
      %v140 = vadd.f32 %v136, %v113
      %v141 = vadd.f32 %v137, %v114
      %v142 = vadd.f32 %v138, %v115
      %143 = vst [vmem:[%s134] sm:$0xff] %v139
      %144 = vst [vmem:[%s134 + $0x8] sm:$0xff] %v140
      %145 = vst [vmem:[%s134 + $0x10] sm:$0xff] %v141
      %146 = vst [vmem:[%s134 + $0x18] sm:$0xff] %v142
    $region25: #{tpu_custom_call.1} parent=1 // pred_fallthru
      _
    // Predicated region
    $region26: #{tpu_custom_call.1} parent=1 // pred_check
      %p147 = pneg %p117
    $region27: #{tpu_custom_call.1} parent=1 // pred_check_branch
      %149 = sbr.rel (%p147) target = $region29
    $region28: #{tpu_custom_call.1} parent=1 // pred_region
      %v150 = vlaneseq
      %v151 = vshrl.u32 %v150, 7
      %v152 = vadd.s32 %v151, 8
      %v153 = vadd.s32 %v151, 16
      %v154 = vadd.s32 %v151, 24
      %v155 = vlaneseq
      %v156 = vand.u32 %v155, 127
      %v157 = vmul.u32 %v151, 128
      %v158 = vmul.u32 %v152, 128
      %v159 = vmul.u32 %v153, 128
      %v160 = vmul.u32 %v154, 128
      %v161 = vadd.s32 %v157, %v156
      %v162 = vadd.s32 %v158, %v156
      %v163 = vadd.s32 %v159, %v156
      %v164 = vadd.s32 %v160, %v156
      %s165 = smul.u32 %s116, 4096
      %s166 = ssub.s32 2048, %s165
      %v167 = vstv %s166
      %vm168 = vcmp.lt.s32.totalorder %v161, %v167
      %vm169 = vcmp.lt.s32.totalorder %v162, %v167
      %vm170 = vcmp.lt.s32.totalorder %v163, %v167
      %vm171 = vcmp.lt.s32.totalorder %v164, %v167
      %v172 = vld [vmem:[#allocation2] sm:$0xff]
      %v173 = vld [vmem:[#allocation2 + $0x8] sm:$0xff]
      %v174 = vld [vmem:[#allocation2 + $0x10] sm:$0xff]
      %v175 = vld [vmem:[#allocation2 + $0x18] sm:$0xff]
      %v176 = vsel %vm168, %v108, 0.0
      %v177 = vsel %vm169, %v109, 0.0
      %v178 = vsel %vm170, %v110, 0.0
      %v179 = vsel %vm171, %v111, 0.0
      %v180 = vadd.f32 %v172, %v176
      %v181 = vadd.f32 %v173, %v177
      %v182 = vadd.f32 %v174, %v178
      %v183 = vadd.f32 %v175, %v179
      %184 = vst [vmem:[#allocation2] sm:$0xff] %v180
      %185 = vst [vmem:[#allocation2 + $0x8] sm:$0xff] %v181
      %186 = vst [vmem:[#allocation2 + $0x10] sm:$0xff] %v182
      %187 = vst [vmem:[#allocation2 + $0x18] sm:$0xff] %v183
      %s188 = scalar_lea.vmem [#allocation2], 32
      %v189 = vld [vmem:[%s188] sm:$0xff]
      %v190 = vld [vmem:[%s188 + $0x8] sm:$0xff]
      %v191 = vld [vmem:[%s188 + $0x10] sm:$0xff]
      %v192 = vld [vmem:[%s188 + $0x18] sm:$0xff]
      %v193 = vsel %vm168, %v112, 0.0
      %v194 = vsel %vm169, %v113, 0.0
      %v195 = vsel %vm170, %v114, 0.0
      %v196 = vsel %vm171, %v115, 0.0
      %v197 = vadd.f32 %v189, %v193
      %v198 = vadd.f32 %v190, %v194
      %v199 = vadd.f32 %v191, %v195
      %v200 = vadd.f32 %v192, %v196
      %201 = vst [vmem:[%s188] sm:$0xff] %v197
      %202 = vst [vmem:[%s188 + $0x8] sm:$0xff] %v198
      %203 = vst [vmem:[%s188 + $0x10] sm:$0xff] %v199
      %204 = vst [vmem:[%s188 + $0x18] sm:$0xff] %v200
    $region29: #{tpu_custom_call.1} parent=1 // pred_fallthru
      _
    // Predicated region
    $region30: #{tpu_custom_call.1} parent=1 // pred_check
      %p205 = pneg %p59
    $region31: #{tpu_custom_call.1} parent=1 // pred_check_branch
      %207 = sbr.rel (%p205) target = $region33
    $region32: #{tpu_custom_call.1} parent=1 // pred_region
      %v208 = vld [vmem:[#allocation2] sm:$0xff]
      %v209 = vld [vmem:[#allocation2 + $0x8] sm:$0xff]
      %v210 = vld [vmem:[#allocation2 + $0x10] sm:$0xff]
      %v211 = vld [vmem:[#allocation2 + $0x18] sm:$0xff]
      %212 = vst [vmem:[#allocation8] sm:$0xff] %v208
      %213 = vst [vmem:[#allocation8 + $0x8] sm:$0xff] %v209
      %214 = vst [vmem:[#allocation8 + $0x10] sm:$0xff] %v210
      %215 = vst [vmem:[#allocation8 + $0x18] sm:$0xff] %v211
      %s216 = scalar_lea.vmem [#allocation2], 32
      %v217 = vld [vmem:[%s216] sm:$0xff]
      %v218 = vld [vmem:[%s216 + $0x8] sm:$0xff]
      %v219 = vld [vmem:[%s216 + $0x10] sm:$0xff]
      %v220 = vld [vmem:[%s216 + $0x18] sm:$0xff]
      %221 = vst [vmem:[#allocation9] sm:$0xff] %v217
      %222 = vst [vmem:[#allocation9 + $0x8] sm:$0xff] %v218
      %223 = vst [vmem:[#allocation9 + $0x10] sm:$0xff] %v219
      %224 = vst [vmem:[#allocation9 + $0x18] sm:$0xff] %v220
    $region33: #{tpu_custom_call.1} parent=1 // pred_fallthru
      _
    // Predicated region
    $region34: #{tpu_custom_call.1} parent=1 // pred_check
      _
    $region35: #{tpu_custom_call.1} parent=1 // pred_check_branch
      %226 = sbr.rel (0) target = $region37
    $region36: #{tpu_custom_call.1} parent=1 // pred_region
      %s228 = ssub.s32 512, 512
      %229 = vsyncadd [#allocation5], %s228
      %s230 = sshll.u32 [#allocation8], 4
      %s231 = int_to_ptr.vmem [resolvable:$true] %s230
      %236 = dma.vmem_to_hbm [thread:$0]  %s231, 512, %s2, [#allocation5], 128, 128, 8
    $region37: #{tpu_custom_call.1} parent=1 // pred_fallthru
      _
    // Predicated region
    $region38: #{tpu_custom_call.1} parent=1 // pred_check
      _
    $region39: #{tpu_custom_call.1} parent=1 // pred_check_branch
      %238 = sbr.rel (0) target = $region41
    $region40: #{tpu_custom_call.1} parent=1 // pred_region
      %s240 = ssub.s32 512, 512
      %241 = vsyncadd [#allocation10], %s240
      %s242 = sshll.u32 [#allocation9], 4
      %s243 = int_to_ptr.vmem [resolvable:$true] %s242
      %248 = dma.vmem_to_hbm [thread:$0]  %s243, 512, %s3, [#allocation10], 128, 128, 8
    $region41: #{tpu_custom_call.1} parent=1 // pred_fallthru
      _
    // Predicated region
    $region42: #{tpu_custom_call.1} parent=1 // pred_check
      _
    $region43: #{tpu_custom_call.1} parent=1 // pred_check_branch
      %250 = sbr.rel (0) target = $region45
    $region44: #{tpu_custom_call.1} parent=1 // pred_region
      %251 = dma.done [#allocation5], 512
    $region45: #{tpu_custom_call.1} parent=1 // pred_fallthru
      _
    // Predicated region
    $region46: #{tpu_custom_call.1} parent=1 // pred_check
      _
    $region47: #{tpu_custom_call.1} parent=1 // pred_check_branch
      %253 = sbr.rel (0) target = $region49
    $region48: #{tpu_custom_call.1} parent=1 // pred_region
      %254 = dma.done [#allocation10], 512
    $region49: #{tpu_custom_call.1} parent=1 // pred_fallthru
      _
    %255 = vsyncpa [#allocation4], 1
    %256 = vsyncpa [#allocation7], 1
    %257 = vsyncpa [#allocation5], 1
    %258 = vsyncpa [#allocation10], 1

</llo_original>
